<compile_context>
chip_gen: v7x
topology: tpu7x:2x2x1
jax: 0.10.0
libtpu: 0.0.40
codegen_flags: <defaults>
</compile_context>

<pallas_src>
import math
import functools

import numpy as np
import jax
import jax.numpy as jnp
from jax.experimental import pallas as pl
from jax.experimental.pallas import tpu as pltpu


_DTYPES = {"bfloat16": jnp.bfloat16, "float32": jnp.float32}
_BPE = {"bfloat16": 2, "float32": 4}


# ----------------------------------------------------------------------------
# Interpolation matrices (host-side numpy): reproduce
# F.interpolate(mode='bilinear', align_corners=False) along one axis as
# out = M @ in.  Rows >= out_size are all-zero, which folds the zero padding
# of batch_images() directly into the matmul output.
# ----------------------------------------------------------------------------
def _bilinear_matrix(in_size, out_size, padded_out_size=None):
    if padded_out_size is None:
        padded_out_size = out_size
    j = np.arange(out_size, dtype=np.float64)
    scale = in_size / out_size
    src = np.maximum((j + 0.5) * scale - 0.5, 0.0)   # torch clamps negative src
    i0 = np.minimum(np.floor(src).astype(np.int64), in_size - 1)
    i1 = np.minimum(i0 + 1, in_size - 1)
    w1 = (src - i0).astype(np.float32)
    w0 = (1.0 - w1).astype(np.float32)
    m = np.zeros((padded_out_size, in_size), dtype=np.float32)
    rows = np.arange(out_size)
    m[rows, i0] += w0
    m[rows, i1] += w1
    return m


# ----------------------------------------------------------------------------
# One-time probes (cached): VMEM budget and input_output_aliases convention
# ----------------------------------------------------------------------------
@functools.lru_cache(maxsize=None)
def _vmem_ceiling_bytes():
    """~0.75x physical VMEM (leaves compiler headroom; ~48 MiB on v7x)."""
    try:
        cap = getattr(pltpu.get_tpu_info(), "vmem_capacity_bytes", None)
    except Exception:
        cap = None
    if not cap:
        cap = 128 * 1024 * 1024          # v5e / v6e physical VMEM
    return int(0.75 * cap)


@functools.lru_cache(maxsize=None)
def _aliases_count_scalar_prefetch():
    """Whether input_output_aliases indices count scalar-prefetch operands.

    Probed once with a tiny kernel (lowering only, no execution) so the aliased
    batch-canvas writer is robust; defaults to counting all positional args.
    """
    def probe_kernel(s_ref, x_ref, o_ref):
        del s_ref
        o_ref[...] = x_ref[...]

    def build(alias_idx):
        return pl.pallas_call(
            probe_kernel,
            out_shape=jax.ShapeDtypeStruct((8, 128), jnp.float32),
            grid_spec=pltpu.PrefetchScalarGridSpec(
                num_scalar_prefetch=1,
                grid=(1,),
                in_specs=[pl.BlockSpec((8, 128), lambda i, s: (0, 0))],
                out_specs=pl.BlockSpec((8, 128), lambda i, s: (0, 0))),
            input_output_aliases={alias_idx: 0})

    s = jax.ShapeDtypeStruct((1,), jnp.int32)
    x = jax.ShapeDtypeStruct((8, 128), jnp.float32)
    try:
        jax.jit(build(1)).lower(s, x)
        return True
    except Exception:
        pass
    try:
        jax.jit(build(0)).lower(s, x)
        return False
    except Exception:
        return True


def _pick_row_tile(h_pad, max_tile=256):
    """MXU-shaped output-row tile: full h_pad if small, else prefer 256 or the
    largest exact divisor >= 128, else a ragged (ceil-div) tail tile.
    # TODO(synk): prefer 128 on v5e (4x128x128 MXU) via a generation query.
    """
    if h_pad <= max_tile:
        return h_pad
    for t in range(max_tile, 127, -8):
        if h_pad % t == 0:
            return t
    return max_tile


# ----------------------------------------------------------------------------
# Pallas kernel: resize (two MXU matmuls with padding folded in) -> affine
# normalization epilogue -> single full-tile store into the batched canvas.
# ----------------------------------------------------------------------------
def _resize_pad_kernel(idx_ref, mean_ref, inv_std_ref, img_ref, wh_ref,
                       wwt_ref, rh_ref, rw_ref, *rest, matmul_dtype):
    # rest = (out_ref,) for the canvas-creating variant, or
    #        (batch_ref, out_ref) for the aliased in-place-update variant
    #        (batch_ref exists only for input_output_aliases).
    del idx_ref                      # only consumed by the output index_map
    out_ref = rest[-1]
    c = pl.program_id(0)

    # Raw channel -> matmul dtype.  Normalization is folded into the epilogue,
    # so the full (Hin, Win) channel is not re-normalized per row tile.
    x = img_ref[0].astype(matmul_dtype)

    # Bilinear resize as two MXU matmuls; zero rows/cols of wh/wwt produce the
    # batch_images() zero padding for free.
    # TODO(synk): per-shape matmul-order selection (col-first for strongly
    # anisotropic resizes) not implemented; row-first composes with row tiling.
    t = jnp.dot(wh_ref[...], x, preferred_element_type=jnp.float32)       # (tile_h, Win)
    acc = jnp.dot(t.astype(matmul_dtype), wwt_ref[...],
                  preferred_element_type=jnp.float32)                     # (tile_h, Wpad)

    # Affine epilogue: resize((x - m) / s) == resize(x)/s - (m/s) * valid_mask,
    # valid_mask = rh (outer) rw  (1 inside (Hout, Wout), 0 in the padding).
    inv_std = inv_std_ref[c]
    y = acc * inv_std - (mean_ref[c] * inv_std) * (rh_ref[...] * rw_ref[...])
    out_ref[0, 0] = y.astype(out_ref.dtype)   # single lane-dense full-tile store


@functools.lru_cache(maxsize=None)
def _build_image_writer(c, h_in, w_in, h_out, w_out, h_pad, w_pad,
                        batch_size, max_c, matmul_dtype_name,
                        canvas_dtype_name, aliased):
    """Jitted writer for one image shape.

    aliased=False: fn(idx, image, mean, inv_std) -> fresh (N, max_c, Hpad, Wpad)
        canvas with image `idx`'s slab written (other slabs are expected to be
        overwritten by later writers).
    aliased=True:  fn(batch, idx, image, mean, inv_std) -> batch with image
        `idx`'s slab written in place (batch donated + aliased to the output).
    """
    matmul_dtype = _DTYPES[matmul_dtype_name]
    canvas_dtype = _DTYPES[canvas_dtype_name]
    bpe = _BPE[matmul_dtype_name]
    out_bpe = _BPE[canvas_dtype_name]

    tile_h = _pick_row_tile(h_pad)
    n_row_tiles = -(-h_pad // tile_h)
    h_grid = n_row_tiles * tile_h          # >= h_pad; ragged tail is masked

    # Interp matrices with padding folded in as zero rows/cols, plus exact-f32
    # validity vectors for the mean correction inside (Hout, Wout).
    wh_np = _bilinear_matrix(h_in, h_out, h_grid)        # (Hgrid, Hin)
    wwt_np = _bilinear_matrix(w_in, w_out, w_pad).T      # (Win, Wpad)
    rh_np = np.zeros((h_grid, 1), np.float32); rh_np[:h_out] = 1.0
    rw_np = np.zeros((1, w_pad), np.float32); rw_np[0, :w_out] = 1.0

    # Per-step VMEM (double-buffered pipeline operands + temporaries), capped
    # generation-aware so the same tiling also fits v7x's 64 MiB.
    est = (2 * h_in * w_in * 4             # image channel (f32, 2 buffers)
           + h_in * w_in * bpe             # in-kernel cast copy
           + 2 * tile_h * h_in * bpe       # row-interp tile
           + 2 * w_in * w_pad * bpe        # col-interp matrix
           + tile_h * w_in * (4 + bpe)     # matmul intermediate (+cast)
           + 2 * tile_h * w_pad * 4        # f32 accumulator / epilogue temps
           + 2 * tile_h * w_pad * out_bpe  # output tile
           + 4 * (tile_h + w_pad) * 4)     # validity vectors
    vmem_limit = int(min(_vmem_ceiling_bytes(), max(32 * 1024 * 1024, 2 * est)))
    # TODO(synk): for very large (Hin, Win) on v7x, add an input column-band
    # grid axis so resident VMEM is bounded independent of the source size.

    in_specs = [
        pl.BlockSpec(memory_space=pltpu.MemorySpace.SMEM),              # mean (C,)
        pl.BlockSpec(memory_space=pltpu.MemorySpace.SMEM),              # 1/std (C,)
        pl.BlockSpec((1, h_in, w_in), lambda ci, j, idx: (ci, 0, 0)),   # channel
        pl.BlockSpec((tile_h, h_in), lambda ci, j, idx: (j, 0)),        # wh tile
        # TODO(synk): pipeline_mode=pl.Buffered(1) on the constant operands
        # below would save one VMEM buffer each.
        pl.BlockSpec((w_in, w_pad), lambda ci, j, idx: (0, 0)),         # wwt
        pl.BlockSpec((tile_h, 1), lambda ci, j, idx: (j, 0)),           # row valid
        pl.BlockSpec((1, w_pad), lambda ci, j, idx: (0, 0)),            # col valid
    ]
    if aliased:
        in_specs.append(pl.BlockSpec(memory_space=pl.ANY))              # canvas

    if aliased:
        n_call_args = 9   # idx, mean, inv_std, image, wh, wwt, rh, rw, batch
        alias_idx = (n_call_args - 1 if _aliases_count_scalar_prefetch()
                     else len(in_specs) - 1)
        input_output_aliases = {alias_idx: 0}
    else:
        input_output_aliases = {}

    flops = 2 * c * (h_grid * h_in * w_in + h_grid * w_in * w_pad)
    bytes_accessed = (c * (h_in * w_in * 4 + h_pad * w_pad * out_bpe)
                      + h_grid * h_in * bpe + w_in * w_pad * bpe)
    cost = pl.CostEstimate(flops=flops, transcendentals=0,
                           bytes_accessed=bytes_accessed)

    kernel = functools.partial(_resize_pad_kernel, matmul_dtype=matmul_dtype)

    pallas_fn = pl.pallas_call(
        kernel,
        out_shape=jax.ShapeDtypeStruct((batch_size, max_c, h_pad, w_pad),
                                       canvas_dtype),
        grid_spec=pltpu.PrefetchScalarGridSpec(
            num_scalar_prefetch=1,
            grid=(c, n_row_tiles),
            in_specs=in_specs,
            out_specs=pl.BlockSpec((1, 1, tile_h, w_pad),
                                   lambda ci, j, idx: (idx[0], ci, j, 0)),
        ),
        input_output_aliases=input_output_aliases,
        compiler_params=pltpu.CompilerParams(
            # Channel axis "arbitrary" so megacore (v7x) shards the finer
            # row-tile axis instead of the 3-wide channel axis.
            dimension_semantics=("arbitrary", "parallel"),
            vmem_limit_bytes=vmem_limit),
        cost_estimate=cost,
    )

    wh = jnp.asarray(wh_np, dtype=matmul_dtype)
    wwt = jnp.asarray(wwt_np, dtype=matmul_dtype)
    rh = jnp.asarray(rh_np)
    rw = jnp.asarray(rw_np)

    if aliased:
        def fn(batch, idx, image, mean, inv_std):
            return pallas_fn(idx, mean, inv_std, image, wh, wwt, rh, rw, batch)
        return jax.jit(fn, donate_argnums=(0,))
    else:
        def fn(idx, image, mean, inv_std):
            return pallas_fn(idx, mean, inv_std, image, wh, wwt, rh, rw)
        return jax.jit(fn)


# ----------------------------------------------------------------------------
# Plain-JAX glue mirroring the torch module
# ----------------------------------------------------------------------------
class ImageList:
    def __init__(self, tensors, image_sizes):
        self.tensors = tensors
        self.image_sizes = image_sizes


def resize_boxes(boxes, original_size, new_size):
    ratio_h = float(new_size[0]) / float(original_size[0])
    ratio_w = float(new_size[1]) / float(original_size[1])
    xmin, ymin, xmax, ymax = (boxes[:, 0], boxes[:, 1], boxes[:, 2], boxes[:, 3])
    return jnp.stack(
        [xmin * ratio_w, ymin * ratio_h, xmax * ratio_w, ymax * ratio_h], axis=1)


def resize_keypoints(keypoints, original_size, new_size):
    ratio_h = float(new_size[0]) / float(original_size[0])
    ratio_w = float(new_size[1]) / float(original_size[1])
    scale = jnp.array([ratio_w, ratio_h] + [1.0] * (keypoints.shape[-1] - 2),
                      dtype=keypoints.dtype)
    return keypoints * scale


class GeneralizedRCNNTransform:
    def __init__(self, min_size, max_size, image_mean, image_std,
                 matmul_dtype=jnp.bfloat16, canvas_dtype=jnp.float32,
                 size_divisible=32):
        if not isinstance(min_size, (list, tuple)):
            min_size = (min_size,)
        self.min_size = min_size
        self.max_size = max_size
        self.image_mean = jnp.asarray(image_mean, jnp.float32)
        self.image_inv_std = 1.0 / jnp.asarray(image_std, jnp.float32)
        self._matmul_dtype_name = (
            "bfloat16" if matmul_dtype in (jnp.bfloat16, "bfloat16") else "float32")
        # canvas_dtype=bf16 halves the dominant HBM write stream (v6e win) when
        # the downstream backbone is bf16; default f32 preserves torch parity.
        self._canvas_dtype_name = (
            "bfloat16" if canvas_dtype in (jnp.bfloat16, "bfloat16") else "float32")
        # size_divisible=128 makes canvas stores lane-dense; default 32 keeps
        # the torch output shape.
        self.size_divisible = size_divisible
        self.training = False  # eval semantics (deterministic)

    def _output_size(self, h, w):
        # TODO(synk): training-mode random.choice(self.min_size) not reproduced;
        # eval semantics (min_size[-1]) used, which is deterministic.
        size = float(self.min_size[-1])
        min_s, max_s = float(min(h, w)), float(max(h, w))
        scale_factor = size / min_s
        if max_s * scale_factor > self.max_size:
            scale_factor = self.max_size / max_s
        return int(math.floor(h * scale_factor)), int(math.floor(w * scale_factor))

    def __call__(self, images, targets=None):
        # TODO(synk): uint8 source images could be cast inside the kernel to
        # quarter the input HBM read stream; f32 inputs kept for torch parity.
        images = [jnp.asarray(img, jnp.float32) for img in images]
        out_sizes = []
        for img in images:
            if img.ndim != 3:
                raise ValueError(
                    "images is expected to be a list of 3d tensors of shape "
                    "[C, H, W], got {}".format(img.shape))
            h, w = img.shape[-2:]
            out_sizes.append(self._output_size(h, w))

        stride = self.size_divisible
        max_c = max(img.shape[0] for img in images)
        h_pad = int(math.ceil(max(s[0] for s in out_sizes) / stride) * stride)
        w_pad = int(math.ceil(max(s[1] for s in out_sizes) / stride) * stride)
        canvas_dtype = _DTYPES[self._canvas_dtype_name]

        # No up-front full-canvas zero write: the first writer creates the
        # canvas and every (image, channel) slab is fully written (padding is
        # folded into the interp matrices).  Only when some image has fewer
        # channels than max_c do we fall back to a zeroed canvas so the unused
        # channel slabs are defined.
        needs_zero_canvas = any(img.shape[0] != max_c for img in images)
        # TODO(synk): zero only the missing channel slabs instead of the full
        # canvas in the needs_zero_canvas case.
        batch = (jnp.zeros((len(images), max_c, h_pad, w_pad), canvas_dtype)
                 if needs_zero_canvas else None)

        mean, inv_std = self.image_mean, self.image_inv_std
        # TODO(synk): bucket same-shape images into one pallas_call (leading
        # image grid axis) to amortize launch / pipeline overhead further.
        for i, img in enumerate(images):
            c, h_in, w_in = img.shape
            idx = jnp.asarray([i], dtype=jnp.int32)
            key = (c, h_in, w_in, out_sizes[i][0], out_sizes[i][1], h_pad, w_pad,
                   len(images), max_c, self._matmul_dtype_name,
                   self._canvas_dtype_name)
            if batch is None:
                writer = _build_image_writer(*key, False)
                batch = writer(idx, img, mean, inv_std)
            else:
                writer = _build_image_writer(*key, True)
                batch = writer(batch, idx, img, mean, inv_std)

            if targets is not None:
                t = dict(targets[i])
                if "boxes" in t:
                    t["boxes"] = resize_boxes(t["boxes"], (h_in, w_in), out_sizes[i])
                if "keypoints" in t:
                    t["keypoints"] = resize_keypoints(
                        t["keypoints"], (h_in, w_in), out_sizes[i])
                # TODO(synk): 'masks' resizing (misc_nn_ops.interpolate) not implemented.
                targets[i] = t

        return ImageList(batch, out_sizes), targets


# ----------------------------------------------------------------------------
# Plain-JAX reference for a single image (correctness check)
# ----------------------------------------------------------------------------
def _reference_norm_resize(image, mean, std, out_size):
    c, h_in, w_in = image.shape
    wh = jnp.asarray(_bilinear_matrix(h_in, out_size[0]))
    ww = jnp.asarray(_bilinear_matrix(w_in, out_size[1]))
    x = (image - mean[:, None, None]) / std[:, None, None]
    return jnp.einsum("oh,chw,pw->cop", wh, x, ww)


if __name__ == "__main__":
    key = jax.random.PRNGKey(0)
    k1, k2, k3 = jax.random.split(key, 3)
    img0 = jax.random.uniform(k1, (3, 16, 24), dtype=jnp.float32)
    img1 = jax.random.uniform(k2, (3, 20, 16), dtype=jnp.float32)

    boxes0 = jnp.array([[1.0, 2.0, 10.0, 12.0], [0.0, 0.0, 5.0, 7.0]], jnp.float32)
    boxes1 = jnp.array([[2.0, 3.0, 14.0, 15.0]], jnp.float32)
    kpts1 = jax.random.uniform(k3, (1, 4, 3), dtype=jnp.float32) * 10.0
    targets = [{"boxes": boxes0}, {"boxes": boxes1, "keypoints": kpts1}]

    mean = [0.485, 0.456, 0.406]
    std = [0.229, 0.224, 0.225]

    # Default bf16-MXU path (loose tolerance) and f32 path (tight tolerance).
    tf_bf16 = GeneralizedRCNNTransform(32, 64, mean, std, matmul_dtype=jnp.bfloat16)
    tf_f32 = GeneralizedRCNNTransform(32, 64, mean, std, matmul_dtype=jnp.float32)

    image_list, targets = tf_bf16([img0, img1], targets)
    batched_bf16 = jax.block_until_ready(image_list.tensors)
    image_list32, _ = tf_f32([img0, img1], None)
    batched_f32 = jax.block_until_ready(image_list32.tensors)

    # shapes / sizes match torch semantics
    assert batched_bf16.shape == (2, 3, 64, 64), batched_bf16.shape
    assert batched_f32.shape == (2, 3, 64, 64), batched_f32.shape
    assert image_list.image_sizes == [(32, 48), (40, 32)], image_list.image_sizes

    mean_a = jnp.asarray(mean, jnp.float32)
    std_a = jnp.asarray(std, jnp.float32)
    ref0 = _reference_norm_resize(img0, mean_a, std_a, (32, 48))
    ref1 = _reference_norm_resize(img1, mean_a, std_a, (40, 32))

    for batched, rtol, atol in ((batched_f32, 1e-5, 1e-5), (batched_bf16, 3e-2, 3e-2)):
        np.testing.assert_allclose(np.asarray(batched[0, :, :32, :48]),
                                   np.asarray(ref0), rtol=rtol, atol=atol)
        np.testing.assert_allclose(np.asarray(batched[1, :, :40, :32]),
                                   np.asarray(ref1), rtol=rtol, atol=atol)
        # padding region is exactly zero (zero interp rows/cols + zero mask)
        assert float(jnp.abs(batched[0, :, 32:, :]).max()) == 0.0
        assert float(jnp.abs(batched[0, :, :, 48:]).max()) == 0.0
        assert float(jnp.abs(batched[1, :, 40:, :]).max()) == 0.0
        assert float(jnp.abs(batched[1, :, :, 32:]).max()) == 0.0

    # box / keypoint resize glue (both images scale by exactly 2x here)
    np.testing.assert_allclose(np.asarray(targets[0]["boxes"]),
                               np.asarray(boxes0) * 2.0, rtol=1e-6, atol=1e-6)
    np.testing.assert_allclose(np.asarray(targets[1]["boxes"]),
                               np.asarray(boxes1) * 2.0, rtol=1e-6, atol=1e-6)

    print("KERNEL_OK")
</pallas_src>

<mosaic_0001>
module attributes {stable_mosaic.version = 11 : i64} {
  func.func @_resize_pad_kernel(%arg0: i32, %arg1: i32, %arg2: memref<1xi32, #tpu.memory_space<smem>>, %arg3: memref<3xf32, #tpu.memory_space<smem>>, %arg4: memref<3xf32, #tpu.memory_space<smem>>, %arg5: memref<1x16x24xf32, #tpu.memory_space<vmem>>, %arg6: memref<64x16xbf16, #tpu.memory_space<vmem>>, %arg7: memref<24x64xbf16, #tpu.memory_space<vmem>>, %arg8: memref<64x1xf32, #tpu.memory_space<vmem>>, %arg9: memref<1x64xf32, #tpu.memory_space<vmem>>, %arg10: memref<1x1x64x64xf32, #tpu.memory_space<vmem>>) attributes {dimension_semantics = [#tpu.dimension_semantics<arbitrary>, #tpu.dimension_semantics<parallel>], iteration_bounds = array<i64: 3, 1>, scalar_prefetch = 1 : i64, scratch_operands = 0 : i64, tpu.core_type = #tpu.core_type<tc>, window_params = [{transform_indices = @transform_0, window_bounds = array<i64: 3>}, {transform_indices = @transform_1, window_bounds = array<i64: 3>}, {transform_indices = @transform_2, window_bounds = array<i64: 1, 16, 24>}, {transform_indices = @transform_3, window_bounds = array<i64: 64, 16>}, {pipeline_mode = #tpu.pipeline_mode<synchronous>, transform_indices = @transform_4, window_bounds = array<i64: 24, 64>}, {transform_indices = @transform_5, window_bounds = array<i64: 64, 1>}, {pipeline_mode = #tpu.pipeline_mode<synchronous>, transform_indices = @transform_6, window_bounds = array<i64: 1, 64>}, {transform_indices = @transform_7, window_bounds = array<i64: 1, 1, 64, 64>}]} {
    %c0 = arith.constant 0 : index
    %c0_0 = arith.constant 0 : index
    %c0_1 = arith.constant 0 : index
    %0 = vector.load %arg5[%c0, %c0_0, %c0_1] : memref<1x16x24xf32, #tpu.memory_space<vmem>>, vector<1x16x24xf32>
    %1 = vector.shape_cast %0 : vector<1x16x24xf32> to vector<16x24xf32>
    %2 = arith.truncf %1 : vector<16x24xf32> to vector<16x24xbf16>
    %c0_2 = arith.constant 0 : index
    %c0_3 = arith.constant 0 : index
    %3 = vector.load %arg6[%c0_2, %c0_3] : memref<64x16xbf16, #tpu.memory_space<vmem>>, vector<64x16xbf16>
    %cst = arith.constant dense<0.000000e+00> : vector<64x24xf32>
    %4 = tpu.matmul %3, %2, %cst {dimension_numbers = #tpu.dot_dimension_numbers<[1], [0], [0], [1], [0, 0, 1, 1], [], []>} : vector<64x16xbf16>, vector<16x24xbf16>, vector<64x24xf32> -> vector<64x24xf32>
    %5 = arith.truncf %4 : vector<64x24xf32> to vector<64x24xbf16>
    %c0_4 = arith.constant 0 : index
    %c0_5 = arith.constant 0 : index
    %6 = vector.load %arg7[%c0_4, %c0_5] : memref<24x64xbf16, #tpu.memory_space<vmem>>, vector<24x64xbf16>
    %cst_6 = arith.constant dense<0.000000e+00> : vector<64x64xf32>
    %7 = tpu.matmul %5, %6, %cst_6 {dimension_numbers = #tpu.dot_dimension_numbers<[1], [0], [0], [1], [0, 0, 1, 1], [], []>} : vector<64x24xbf16>, vector<24x64xbf16>, vector<64x64xf32> -> vector<64x64xf32>
    %8 = arith.index_cast %arg0 : i32 to index
    %9 = memref.load %arg4[%8] : memref<3xf32, #tpu.memory_space<smem>>
    %10 = vector.broadcast %9 : f32 to vector<64x64xf32>
    %11 = arith.mulf %7, %10 : vector<64x64xf32>
    %12 = arith.index_cast %arg0 : i32 to index
    %13 = memref.load %arg3[%12] : memref<3xf32, #tpu.memory_space<smem>>
    %14 = arith.mulf %13, %9 : f32
    %c0_7 = arith.constant 0 : index
    %c0_8 = arith.constant 0 : index
    %15 = vector.load %arg8[%c0_7, %c0_8] : memref<64x1xf32, #tpu.memory_space<vmem>>, vector<64x1xf32>
    %c0_9 = arith.constant 0 : index
    %c0_10 = arith.constant 0 : index
    %16 = vector.load %arg9[%c0_9, %c0_10] : memref<1x64xf32, #tpu.memory_space<vmem>>, vector<1x64xf32>
    %17 = vector.broadcast %15 : vector<64x1xf32> to vector<64x64xf32>
    %18 = vector.broadcast %16 : vector<1x64xf32> to vector<64x64xf32>
    %19 = arith.mulf %17, %18 : vector<64x64xf32>
    %20 = vector.broadcast %14 : f32 to vector<64x64xf32>
    %21 = arith.mulf %20, %19 : vector<64x64xf32>
    %22 = arith.subf %11, %21 : vector<64x64xf32>
    %c0_11 = arith.constant 0 : index
    %c0_12 = arith.constant 0 : index
    %c0_13 = arith.constant 0 : index
    %c0_14 = arith.constant 0 : index
    %23 = vector.load %arg10[%c0_11, %c0_12, %c0_13, %c0_14] : memref<1x1x64x64xf32, #tpu.memory_space<vmem>>, vector<1x1x64x64xf32>
    %24 = vector.shape_cast %23 : vector<1x1x64x64xf32> to vector<64x64xf32>
    %25 = vector.shape_cast %22 : vector<64x64xf32> to vector<1x1x64x64xf32>
    tpu.vector_store %arg10[%c0_11, %c0_12, %c0_13, %c0_14], %25 {strides = array<i32>} : memref<1x1x64x64xf32, #tpu.memory_space<vmem>>, vector<1x1x64x64xf32>,
    return
  }
  func.func @transform_0(%arg0: i32, %arg1: i32, %arg2: memref<1xi32, #tpu.memory_space<smem>>) -> i32 {
    %c0_i32 = arith.constant 0 : i32
    %c0_i32_0 = arith.constant 0 : i32
    return %c0_i32 : i32
  }
  func.func @transform_1(%arg0: i32, %arg1: i32, %arg2: memref<1xi32, #tpu.memory_space<smem>>) -> i32 {
    %c0_i32 = arith.constant 0 : i32
    %c0_i32_0 = arith.constant 0 : i32
    return %c0_i32 : i32
  }
  func.func @transform_2(%arg0: i32, %arg1: i32, %arg2: memref<1xi32, #tpu.memory_space<smem>>) -> (i32, i32, i32) {
    %c0_i32 = arith.constant 0 : i32
    %c0_i32_0 = arith.constant 0 : i32
    %c0_i32_1 = arith.constant 0 : i32
    return %arg0, %c0_i32, %c0_i32_0 : i32, i32, i32
  }
  func.func @transform_3(%arg0: i32, %arg1: i32, %arg2: memref<1xi32, #tpu.memory_space<smem>>) -> (i32, i32) {
    %c0_i32 = arith.constant 0 : i32
    %c0_i32_0 = arith.constant 0 : i32
    return %arg1, %c0_i32 : i32, i32
  }
  func.func @transform_4(%arg0: i32, %arg1: i32, %arg2: memref<1xi32, #tpu.memory_space<smem>>) -> (i32, i32) {
    %c0_i32 = arith.constant 0 : i32
    %c0_i32_0 = arith.constant 0 : i32
    %c0_i32_1 = arith.constant 0 : i32
    return %c0_i32, %c0_i32_0 : i32, i32
  }
  func.func @transform_5(%arg0: i32, %arg1: i32, %arg2: memref<1xi32, #tpu.memory_space<smem>>) -> (i32, i32) {
    %c0_i32 = arith.constant 0 : i32
    %c0_i32_0 = arith.constant 0 : i32
    return %arg1, %c0_i32 : i32, i32
  }
  func.func @transform_6(%arg0: i32, %arg1: i32, %arg2: memref<1xi32, #tpu.memory_space<smem>>) -> (i32, i32) {
    %c0_i32 = arith.constant 0 : i32
    %c0_i32_0 = arith.constant 0 : i32
    %c0_i32_1 = arith.constant 0 : i32
    return %c0_i32, %c0_i32_0 : i32, i32
  }
  func.func @transform_7(%arg0: i32, %arg1: i32, %arg2: memref<1xi32, #tpu.memory_space<smem>>) -> (i32, i32, i32, i32) {
    %c0 = arith.constant 0 : index
    %0 = memref.load %arg2[%c0] : memref<1xi32, #tpu.memory_space<smem>>
    %c0_i32 = arith.constant 0 : i32
    %c0_i32_0 = arith.constant 0 : i32
    return %0, %arg0, %arg1, %c0_i32 : i32, i32, i32, i32
  }
}

</mosaic_0001>

<llo_original>
// kernel: fn.1
$region0: #{fn.1}
  #allocation0 [shape = 'u32[]', space=smem, size = 0x4, offset = 0x4, fixed_abs, tag = 'smem constant byte address 0x4 - core index']
  #allocation1 [shape = 'u32[144,128]{1,0:T(1,128)}', space=vmem, size = 0x12000, scoped, tag = 'internal scratch']
  #allocation2 [shape = 's32[1]{0}', space=sflag, size = 0x4, scoped, tag = 'scoped memory for fn.1']
  #allocation3 [shape = 's32[1]{0:T(128)S(6)}', space=smem, size = 0x200, scoped, tag = 'prefetched SMEM operand 0']
  %s0 = inlined_call_operand.<no memory space> [shape: s32[1], index: 0, kind: input, shape index: {}]
  %s1 = inlined_call_operand.vmem [shape: f32[3], index: 1, kind: input, shape index: {}]
  %s2 = inlined_call_operand.vmem [shape: f32[3], index: 2, kind: input, shape index: {}]
  %s3 = inlined_call_operand.hbm [shape: f32[3,16,24], index: 3, kind: input, shape index: {}]
  %s4 = inlined_call_operand.vmem [shape: bf16[64,16], index: 4, kind: input, shape index: {}]
  %s5 = inlined_call_operand.hbm [shape: bf16[24,64], index: 5, kind: input, shape index: {}]
  %s6 = inlined_call_operand.hbm [shape: f32[64,1], index: 6, kind: input, shape index: {}]
  %s7 = inlined_call_operand.hbm [shape: f32[1,64], index: 7, kind: input, shape index: {}]
  %s8 = inlined_call_operand.hbm [shape: f32[2,3,64,64], index: 8, kind: output, shape index: {}]
  %s9 = sld [smem:[#allocation0]]
  $region85: #{fn.1} parent=0
    _
  %s11 = ssub.s32 1, %s9
  %s12 = scalar_select 0, %s11, %s9
  %13 = sst [smem:[#allocation3]] %s0
  $region1: #{fn.1} parent=0
    #allocation4 [shape = 'u8[512]{0}', space=smem, size = 0x200, scoped, tag = 'input window, operand 1, single buffered']
    #allocation5 [shape = 's32[2]{0}', space=sflag, size = 0x8, scoped, tag = 'scoped memory for fn.1']
    #allocation6 [shape = 's32[2]{0}', space=sflag, size = 0x8, scoped, tag = 'scoped memory for fn.1']
    #allocation7 [shape = 's32[2]{0}', space=sflag, size = 0x8, scoped, tag = 'scoped memory for fn.1']
    #allocation8 [shape = 'u8[512]{0}', space=smem, size = 0x200, scoped, tag = 'input window, operand 2, single buffered']
    #allocation9 [shape = 's32[1]{0}', space=sflag, size = 0x4, scoped, tag = 'scoped memory for fn.1']
    #allocation10 [shape = 'u8[16384]{0}', space=vmem, size = 0x4000, scoped, tag = 'input window, operand 3']
    #allocation11 [shape = 'u8[6144]{0}', space=vmem, size = 0x1800, scoped, tag = 'input window, operand 5, single buffered']
    #allocation12 [shape = 's32[1]{0}', space=sflag, size = 0x4, scoped, tag = 'scoped memory for fn.1']
    #allocation13 [shape = 'u8[32768]{0}', space=vmem, size = 0x8000, scoped, tag = 'input window, operand 6, single buffered']
    #allocation14 [shape = 'u8[512]{0}', space=vmem, size = 0x400, scoped, tag = 'input window, operand 7, single buffered']
    #allocation15 [shape = 's32[1]{0}', space=sflag, size = 0x4, scoped, tag = 'scoped memory for fn.1']
    #allocation16 [shape = 'u8[65536]{0}', space=vmem, size = 0x10000, scoped, tag = 'output window, operand 0']
    %14 = vsyncpa [#allocation7], 0
    %15 = vsyncpa [#allocation9], 0
    %16 = vsyncpa [#allocation5], 0
    %s17 = scalar_lea.sflag [#allocation5], 1
    %18 = vsyncpa %s17, 0
    %19 = vsyncpa [#allocation12], 0
    %20 = vsyncpa [#allocation15], 0
    %21 = vsyncpa [#allocation6], 0
    %s22 = scalar_lea.sflag [#allocation6], 1
    %23 = vsyncpa %s22, 0
    loop: start=0, step=1, limit=5
    $region2: #{fn.1} parent=1 // loop_pre_header
      _
    $region3: #{fn.1} parent=1 // loop_header
      %s25 = sphi 0, %s29
      %p26 = scmp.ge.s32.totalorder %s25, 5
      %s32 = sphi 0, %s44
      %s33 = sphi 0, %s40
      %s34 = sphi 0, %s32
      %s35 = sphi 0, %s33
      %s36 = sphi 0, %s34
      %s37 = sphi 0, %s35
      %s45 = sphi 0, %s45
      %s47 = sphi 0, %s45
      %s48 = sphi 0, %s47
      %s62 = sphi 0, %s48
      %s66 = sphi 0, %s66
      %s68 = sphi 0, %s66
      %s69 = sphi 0, %s68
      %s83 = sphi 0, %s69
      %s89 = sphi 0, %s91
      %s92 = sphi 0, %s89
      %s93 = sphi 0, %s92
      %s109 = sphi 0, %s93
      %s115 = sphi 0, %s117
      %s118 = sphi 0, %s115
      %s119 = sphi 0, %s118
      %s135 = sphi 0, %s119
      %s139 = sphi 0, %s139
      %s141 = sphi 0, %s139
      %s142 = sphi 0, %s141
      %s156 = sphi 0, %s142
      %s162 = sphi 0, %s164
      %s165 = sphi 0, %s162
      %s166 = sphi 0, %s165
      %s182 = sphi 0, %s166
      %s186 = sphi 0, %s186
      %s188 = sphi 0, %s186
      %s189 = sphi 0, %s188
      %s203 = sphi 0, %s189
      %s215 = sphi 0, %s217
      %s218 = sphi 0, %s215
      %s219 = sphi 0, %s218
      %s235 = sphi 0, %s219
    $region4: #{fn.1} parent=1 // loop_header_branch
      %28 = sbr.rel (%p26) target = $region8
    $region5: #{fn.1} parent=1 // loop_body
      %s30 = ssub.s32 %s25, 1
      %s31 = ssub.s32 %s25, 2
      %s38 = sadd.s32 1, %s33
      %p39 = scmp.ge.s32.totalorder %s38, 1
      %s40 = scalar_select %p39, 0, %s38
      %s41 = sadd.s32 1, %s32
      %s42 = scalar_select %p39, %s41, %s32
      %p43 = scmp.ge.s32.totalorder %s42, 3
      %s44 = scalar_select %p43, 0, %s42
      %s46 = sadd.s32 %s45, 1
      %p49 = scmp.eq.s32.totalorder %s25, 2
      %p50 = scmp.ne.s32.totalorder %s45, %s47
      %p51 = scmp.eq.s32.totalorder %s25, 0
      %p52 = por %p50, %p51
      %p53 = scmp.ne.s32.totalorder %s45, %s47
      %p54 = scmp.eq.s32.totalorder %s30, 2
      %p55 = por %p53, %p54
      %p56 = scmp.ne.s32.totalorder %s47, %s48
      %p57 = scmp.eq.s32.totalorder %s30, 0
      %p58 = por %p56, %p57
      %p59 = scmp.ne.s32.totalorder %s47, %s48
      %p60 = scmp.eq.s32.totalorder %s31, 2
      %p61 = por %p59, %p60
      %p63 = scmp.ne.s32.totalorder %s48, %s62
      %p64 = scmp.eq.s32.totalorder %s31, 0
      %p65 = por %p63, %p64
      %s67 = sadd.s32 %s66, 1
      %p70 = scmp.eq.s32.totalorder %s25, 2
      %p71 = scmp.ne.s32.totalorder %s66, %s68
      %p72 = scmp.eq.s32.totalorder %s25, 0
      %p73 = por %p71, %p72
      %p74 = scmp.ne.s32.totalorder %s66, %s68
      %p75 = scmp.eq.s32.totalorder %s30, 2
      %p76 = por %p74, %p75
      %p77 = scmp.ne.s32.totalorder %s68, %s69
      %p78 = scmp.eq.s32.totalorder %s30, 0
      %p79 = por %p77, %p78
      %p80 = scmp.ne.s32.totalorder %s68, %s69
      %p81 = scmp.eq.s32.totalorder %s31, 2
      %p82 = por %p80, %p81
      %p84 = scmp.ne.s32.totalorder %s69, %s83
      %p85 = scmp.eq.s32.totalorder %s31, 0
      %p86 = por %p84, %p85
      %s87 = ssub.s32 %s32, %s44
      %p88 = scmp.eq.s32.totalorder %s87, 0
      %s90 = sadd.s32 %s89, 1
      %s91 = scalar_select %p88, %s89, %s90
      %p94 = pneg %p88
      %p95 = scmp.eq.s32.totalorder %s25, 2
      %p96 = por %p94, %p95
      %p97 = scmp.ne.s32.totalorder %s89, %s92
      %p98 = scmp.eq.s32.totalorder %s25, 0
      %p99 = por %p97, %p98
      %p100 = scmp.ne.s32.totalorder %s89, %s92
      %p101 = scmp.eq.s32.totalorder %s30, 2
      %p102 = por %p100, %p101
      %p103 = scmp.ne.s32.totalorder %s92, %s93
      %p104 = scmp.eq.s32.totalorder %s30, 0
      %p105 = por %p103, %p104
      %p106 = scmp.ne.s32.totalorder %s92, %s93
      %p107 = scmp.eq.s32.totalorder %s31, 2
      %p108 = por %p106, %p107
      %p110 = scmp.ne.s32.totalorder %s93, %s109
      %p111 = scmp.eq.s32.totalorder %s31, 0
      %p112 = por %p110, %p111
      %s113 = ssub.s32 %s33, %s40
      %p114 = scmp.eq.s32.totalorder %s113, 0
      %s116 = sadd.s32 %s115, 1
      %s117 = scalar_select %p114, %s115, %s116
      %p120 = pneg %p114
      %p121 = scmp.eq.s32.totalorder %s25, 2
      %p122 = por %p120, %p121
      %p123 = scmp.ne.s32.totalorder %s115, %s118
      %p124 = scmp.eq.s32.totalorder %s25, 0
      %p125 = por %p123, %p124
      %p126 = scmp.ne.s32.totalorder %s115, %s118
      %p127 = scmp.eq.s32.totalorder %s30, 2
      %p128 = por %p126, %p127
      %p129 = scmp.ne.s32.totalorder %s118, %s119
      %p130 = scmp.eq.s32.totalorder %s30, 0
      %p131 = por %p129, %p130
      %p132 = scmp.ne.s32.totalorder %s118, %s119
      %p133 = scmp.eq.s32.totalorder %s31, 2
      %p134 = por %p132, %p133
      %p136 = scmp.ne.s32.totalorder %s119, %s135
      %p137 = scmp.eq.s32.totalorder %s31, 0
      %p138 = por %p136, %p137
      %s140 = sadd.s32 %s139, 1
      %p143 = scmp.eq.s32.totalorder %s25, 2
      %p144 = scmp.ne.s32.totalorder %s139, %s141
      %p145 = scmp.eq.s32.totalorder %s25, 0
      %p146 = por %p144, %p145
      %p147 = scmp.ne.s32.totalorder %s139, %s141
      %p148 = scmp.eq.s32.totalorder %s30, 2
      %p149 = por %p147, %p148
      %p150 = scmp.ne.s32.totalorder %s141, %s142
      %p151 = scmp.eq.s32.totalorder %s30, 0
      %p152 = por %p150, %p151
      %p153 = scmp.ne.s32.totalorder %s141, %s142
      %p154 = scmp.eq.s32.totalorder %s31, 2
      %p155 = por %p153, %p154
      %p157 = scmp.ne.s32.totalorder %s142, %s156
      %p158 = scmp.eq.s32.totalorder %s31, 0
      %p159 = por %p157, %p158
      %s160 = ssub.s32 %s33, %s40
      %p161 = scmp.eq.s32.totalorder %s160, 0
      %s163 = sadd.s32 %s162, 1
      %s164 = scalar_select %p161, %s162, %s163
      %p167 = pneg %p161
      %p168 = scmp.eq.s32.totalorder %s25, 2
      %p169 = por %p167, %p168
      %p170 = scmp.ne.s32.totalorder %s162, %s165
      %p171 = scmp.eq.s32.totalorder %s25, 0
      %p172 = por %p170, %p171
      %p173 = scmp.ne.s32.totalorder %s162, %s165
      %p174 = scmp.eq.s32.totalorder %s30, 2
      %p175 = por %p173, %p174
      %p176 = scmp.ne.s32.totalorder %s165, %s166
      %p177 = scmp.eq.s32.totalorder %s30, 0
      %p178 = por %p176, %p177
      %p179 = scmp.ne.s32.totalorder %s165, %s166
      %p180 = scmp.eq.s32.totalorder %s31, 2
      %p181 = por %p179, %p180
      %p183 = scmp.ne.s32.totalorder %s166, %s182
      %p184 = scmp.eq.s32.totalorder %s31, 0
      %p185 = por %p183, %p184
      %s187 = sadd.s32 %s186, 1
      %p190 = scmp.eq.s32.totalorder %s25, 2
      %p191 = scmp.ne.s32.totalorder %s186, %s188
      %p192 = scmp.eq.s32.totalorder %s25, 0
      %p193 = por %p191, %p192
      %p194 = scmp.ne.s32.totalorder %s186, %s188
      %p195 = scmp.eq.s32.totalorder %s30, 2
      %p196 = por %p194, %p195
      %p197 = scmp.ne.s32.totalorder %s188, %s189
      %p198 = scmp.eq.s32.totalorder %s30, 0
      %p199 = por %p197, %p198
      %p200 = scmp.ne.s32.totalorder %s188, %s189
      %p201 = scmp.eq.s32.totalorder %s31, 2
      %p202 = por %p200, %p201
      %p204 = scmp.ne.s32.totalorder %s189, %s203
      %p205 = scmp.eq.s32.totalorder %s31, 0
      %p206 = por %p204, %p205
      %s207 = sld [smem:[#allocation3]]
      %s208 = sld [smem:[#allocation3]]
      %s209 = ssub.s32 %s207, %s208
      %s210 = ssub.s32 %s32, %s44
      %s211 = sor.u32 %s209, %s210
      %s212 = ssub.s32 %s33, %s40
      %s213 = sor.u32 %s211, %s212
      %p214 = scmp.eq.s32.totalorder %s213, 0
      %s216 = sadd.s32 %s215, 1
      %s217 = scalar_select %p214, %s215, %s216
      %p220 = pneg %p214
      %p221 = scmp.eq.s32.totalorder %s25, 2
      %p222 = por %p220, %p221
      %p223 = scmp.ne.s32.totalorder %s215, %s218
      %p224 = scmp.eq.s32.totalorder %s25, 0
      %p225 = por %p223, %p224
      %p226 = scmp.ne.s32.totalorder %s215, %s218
      %p227 = scmp.eq.s32.totalorder %s30, 2
      %p228 = por %p226, %p227
      %p229 = scmp.ne.s32.totalorder %s218, %s219
      %p230 = scmp.eq.s32.totalorder %s30, 0
      %p231 = por %p229, %p230
      %p232 = scmp.ne.s32.totalorder %s218, %s219
      %p233 = scmp.eq.s32.totalorder %s31, 2
      %p234 = por %p232, %p233
      %p236 = scmp.ne.s32.totalorder %s219, %s235
      %p237 = scmp.eq.s32.totalorder %s31, 0
      %p238 = por %p236, %p237
      %p239 = scmp.le.s32.totalorder 1, %s25
      %p240 = scmp.lt.s32.totalorder %s25, 4
      %p241 = pnand %p239, %p240
      %p242 = pneg %p241
      // Predicated region
      $region9: #{fn.1} parent=5 // pred_check
        _
      $region10: #{fn.1} parent=5 // pred_check_branch
        %244 = sbr.rel (%p241) target = $region12
      $region11: #{fn.1} parent=5 // pred_region
        %s245 = ssub.s32 %s25, 1
        // Predicated region
        $region13: #{fn.1} parent=11 // pred_check
          %p246 = pneg %p58
        $region14: #{fn.1} parent=11 // pred_check_branch
          %248 = sbr.rel (%p246) target = $region16
        $region15: #{fn.1} parent=11 // pred_region
          %s250 = ssub.s32 16, 16
          %251 = vsyncadd [#allocation7], %s250
          %s253 = sshll.u32 %s1, 4
          %s254 = int_to_ptr.vmem [resolvable:$true] %s253
          %256 = dma.vmem_to_smem %s254, 16, [#allocation4], [#allocation7]
        $region16: #{fn.1} parent=11 // pred_fallthru
          _
        // Predicated region
        $region17: #{fn.1} parent=11 // pred_check
          %p257 = pneg %p79
        $region18: #{fn.1} parent=11 // pred_check_branch
          %259 = sbr.rel (%p257) target = $region20
        $region19: #{fn.1} parent=11 // pred_region
          %s261 = ssub.s32 16, 16
          %262 = vsyncadd [#allocation9], %s261
          %s264 = sshll.u32 %s2, 4
          %s265 = int_to_ptr.vmem [resolvable:$true] %s264
          %267 = dma.vmem_to_smem %s265, 16, [#allocation8], [#allocation9]
        $region20: #{fn.1} parent=11 // pred_fallthru
          _
        // Predicated region
        $region21: #{fn.1} parent=11 // pred_check
          %p268 = pneg %p131
        $region22: #{fn.1} parent=11 // pred_check_branch
          %270 = sbr.rel (%p268) target = $region24
        $region23: #{fn.1} parent=11 // pred_region
          %s271 = smul.u32 8, %s35
          %p272 = scmp.lt.s32.totalorder %s271, 7
          %s273 = scalar_select %p272, %s271, 7
          %s274 = smul.addr %s273, 4
          %s275 = scalar_lea.vmem %s4, %s274
          %s276 = smul.u32 8, %s35
        $region24: #{fn.1} parent=11 // pred_fallthru
          _
        // Predicated region
        $region25: #{fn.1} parent=11 // pred_check
          %p277 = pneg %p152
        $region26: #{fn.1} parent=11 // pred_check_branch
          %279 = sbr.rel (%p277) target = $region28
        $region27: #{fn.1} parent=11 // pred_region
          %s281 = ssub.s32 192, 192
          %282 = vsyncadd [#allocation12], %s281
          %s283 = sshll.u32 [#allocation11], 4
          %s284 = int_to_ptr.vmem [resolvable:$true] %s283
          %289 = dma.hbm_to_vmem [thread:$0]  %s5, 192, %s284, [#allocation12], 64, 64, 4
        $region28: #{fn.1} parent=11 // pred_fallthru
          _
        // Predicated region
        $region29: #{fn.1} parent=11 // pred_check
          %p290 = pneg %p178
        $region30: #{fn.1} parent=11 // pred_check_branch
          %292 = sbr.rel (%p290) target = $region32
        $region31: #{fn.1} parent=11 // pred_region
          %s293 = smul.u32 8, %s35
          %s295 = ssub.s32 1024, 1024
          %296 = vsyncadd [#allocation12], %s295
          %s297 = smul.addr %s293, 128
          %s298 = scalar_lea.hbm %s6, %s297
          %s299 = sshll.u32 [#allocation13], 4
          %s300 = int_to_ptr.vmem [resolvable:$true] %s299
          %305 = dma.hbm_to_vmem [thread:$0]  %s298, 1024, %s300, [#allocation12], 128, 128, 8
        $region32: #{fn.1} parent=11 // pred_fallthru
          _
        // Predicated region
        $region33: #{fn.1} parent=11 // pred_check
          %p306 = pneg %p199
        $region34: #{fn.1} parent=11 // pred_check_branch
          %308 = sbr.rel (%p306) target = $region36
        $region35: #{fn.1} parent=11 // pred_region
          %s310 = ssub.s32 16, 16
          %311 = vsyncadd [#allocation15], %s310
          %s313 = sshll.u32 [#allocation14], 4
          %s314 = int_to_ptr.vmem [resolvable:$true] %s313
          %316 = dma.hbm_to_vmem [thread:$0]  %s7, 16, %s314, [#allocation15]
        $region36: #{fn.1} parent=11 // pred_fallthru
          _
      $region12: #{fn.1} parent=5 // pred_fallthru
        _
      %p317 = scmp.lt.s32.totalorder %s25, 3
      // Predicated region
      $region37: #{fn.1} parent=5 // pred_check
        %p318 = pneg %p317
      $region38: #{fn.1} parent=5 // pred_check_branch
        %320 = sbr.rel (%p318) target = $region40
      $region39: #{fn.1} parent=5 // pred_region
        // Predicated region
        $region41: #{fn.1} parent=39 // pred_check
          %p321 = pneg %p99
        $region42: #{fn.1} parent=39 // pred_check_branch
          %323 = sbr.rel (%p321) target = $region44
        $region43: #{fn.1} parent=39 // pred_region
          %s324 = sand.u32 %s89, 1
          %s325 = scalar_lea.sflag [#allocation5], %s324
          %s326 = sand.u32 %s89, 1
          %s327 = smul.addr %s326, 16
          %s328 = scalar_lea.vmem [#allocation10], %s327
          %s330 = ssub.s32 256, 256
          %331 = vsyncadd %s325, %s330
          %s332 = smul.addr %s32, 2
          %s333 = smul.addr %s332, 128
          %s334 = scalar_lea.hbm %s3, %s333
          %s335 = sshll.u32 %s328, 4
          %s336 = int_to_ptr.vmem [resolvable:$true] %s335
          %341 = dma.hbm_to_vmem [thread:$0]  %s334, 256, %s336, %s325, 128, 128, 8
        $region44: #{fn.1} parent=39 // pred_fallthru
          _
      $region40: #{fn.1} parent=5 // pred_fallthru
        _
      %p342 = scmp.le.s32.totalorder 1, %s25
      %p343 = scmp.lt.s32.totalorder %s25, 4
      %p344 = pnand %p342, %p343
      %p345 = pneg %p344
      // Predicated region
      $region45: #{fn.1} parent=5 // pred_check
        _
      $region46: #{fn.1} parent=5 // pred_check_branch
        %347 = sbr.rel (%p344) target = $region48
      $region47: #{fn.1} parent=5 // pred_region
        %s348 = ssub.s32 %s25, 1
        // Predicated region
        $region49: #{fn.1} parent=47 // pred_check
          %p349 = pneg %p58
        $region50: #{fn.1} parent=47 // pred_check_branch
          %351 = sbr.rel (%p349) target = $region52
        $region51: #{fn.1} parent=47 // pred_region
          %352 = dma.done [#allocation7], 16
        $region52: #{fn.1} parent=47 // pred_fallthru
          _
        // Predicated region
        $region53: #{fn.1} parent=47 // pred_check
          %p353 = pneg %p79
        $region54: #{fn.1} parent=47 // pred_check_branch
          %355 = sbr.rel (%p353) target = $region56
        $region55: #{fn.1} parent=47 // pred_region
          %356 = dma.done [#allocation9], 16
        $region56: #{fn.1} parent=47 // pred_fallthru
          _
        %s357 = sand.u32 %s92, 1
        %s358 = scalar_lea.sflag [#allocation5], %s357
        %s359 = sand.u32 %s92, 1
        %s360 = smul.addr %s359, 16
        %s361 = scalar_lea.vmem [#allocation10], %s360
        // Predicated region
        $region57: #{fn.1} parent=47 // pred_check
          %p362 = pneg %p105
        $region58: #{fn.1} parent=47 // pred_check_branch
          %364 = sbr.rel (%p362) target = $region60
        $region59: #{fn.1} parent=47 // pred_region
          %365 = dma.done %s358, 256
        $region60: #{fn.1} parent=47 // pred_fallthru
          _
        // Predicated region
        $region61: #{fn.1} parent=47 // pred_check
          %p366 = pneg %p152
        $region62: #{fn.1} parent=47 // pred_check_branch
          %368 = sbr.rel (%p366) target = $region64
        $region63: #{fn.1} parent=47 // pred_region
          %369 = dma.done [#allocation12], 192
        $region64: #{fn.1} parent=47 // pred_fallthru
          _
        // Predicated region
        $region65: #{fn.1} parent=47 // pred_check
          %p370 = pneg %p178
        $region66: #{fn.1} parent=47 // pred_check_branch
          %372 = sbr.rel (%p370) target = $region68
        $region67: #{fn.1} parent=47 // pred_region
          %373 = dma.done [#allocation12], 1024
        $region68: #{fn.1} parent=47 // pred_fallthru
          _
        // Predicated region
        $region69: #{fn.1} parent=47 // pred_check
          %p374 = pneg %p199
        $region70: #{fn.1} parent=47 // pred_check_branch
          %376 = sbr.rel (%p374) target = $region72
        $region71: #{fn.1} parent=47 // pred_region
          %377 = dma.done [#allocation15], 16
        $region72: #{fn.1} parent=47 // pred_fallthru
          _
        %378 = sfence
        %p379 = pneg %p58
        %p380 = pneg %p55
        %p381 = pneg %p79
        %p382 = pneg %p76
        %s383 = sand.u32 %s92, 1
        %s384 = scalar_lea.sflag [#allocation5], %s383
        %s385 = sand.u32 %s92, 1
        %s386 = smul.addr %s385, 16
        %s387 = scalar_lea.vmem [#allocation10], %s386
        %p388 = pneg %p105
        %p389 = pneg %p102
        %s390 = smul.u32 8, %s35
        %p391 = scmp.lt.s32.totalorder %s390, 7
        %s392 = scalar_select %p391, %s390, 7
        %s393 = smul.addr %s392, 4
        %s394 = scalar_lea.vmem %s4, %s393
        %p395 = pneg %p131
        %p396 = pneg %p128
        %p397 = pneg %p152
        %p398 = pneg %p149
        %p399 = pneg %p178
        %p400 = pneg %p175
        %p401 = pneg %p199
        %p402 = pneg %p196
        %p403 = pneg %p231
        %p404 = pneg %p228
        %s405 = sand.u32 %s218, 1
        %s406 = scalar_lea.sflag [#allocation6], %s405
        %s407 = sand.u32 %s218, 1
        %s408 = smul.addr %s407, 64
        %s409 = scalar_lea.vmem [#allocation16], %s408
        %s410 = smul.u32 8, %s35
        %p411 = scmp.lt.s32.totalorder %s410, 7
        %s412 = scalar_select %p411, %s410, 7
        %s413 = smul.addr %s412, 4
        %s414 = scalar_lea.vmem %s4, %s413
        %s415 = smul.u32 8, %s35
        %s416 = smul.u32 8, %s35
        %s417 = sld [smem:[#allocation3]]
        %s418 = smul.u32 8, %s35
        %v420 = vld [vmem:[%s361] sm:$0xff]
        %v421 = vld [vmem:[%s361 + $0x8] sm:$0xff]
        %v422 = vpack.c.bf16 %v421, %v420
        %v423 = vld [vmem:[%s414] sm:$0xf]
        %v424 = vld [vmem:[%s414 + $0x4] sm:$0xf]
        %v425 = vld [vmem:[%s414 + $0x8] sm:$0xf]
        %v426 = vld [vmem:[%s414 + $0xc] sm:$0xf]
        %v427 = vld [vmem:[%s414 + $0x10] sm:$0xf]
        %v428 = vld [vmem:[%s414 + $0x14] sm:$0xf]
        %v429 = vld [vmem:[%s414 + $0x18] sm:$0xf]
        %v430 = vld [vmem:[%s414 + $0x1c] sm:$0xf]
        %v439 = vunpack.c.l.b16 %v423
        %v440 = vunpack.c.l.b16 %v424
        %v441 = vunpack.c.l.b16 %v425
        %v442 = vunpack.c.l.b16 %v426
        %v443 = vunpack.c.l.b16 %v427
        %v444 = vunpack.c.l.b16 %v428
        %v445 = vunpack.c.l.b16 %v429
        %v446 = vunpack.c.l.b16 %v430
        %v447 = vpack.c.b16 %v440, %v439
        %v448 = vpack.c.b16 %v442, %v441
        %v449 = vpack.c.b16 %v444, %v443
        %v450 = vpack.c.b16 %v446, %v445
        %vm451 = vcmask 130048
        %v453 = vsel %vm451, %v447, 0
        %v456 = vsel %vm451, %v448, 0
        %v459 = vsel %vm451, %v449, 0
        %v462 = vsel %vm451, %v450, 0
        %464 = vmatprep.subr.bf16.mxu0 0
        %465 = vmatpush1.bf16.msra.mxu0 %v422
        %466 = vmatprep.subr.bf16.mxu0 0
        %467 = vmatpush1.bf16.msra.mxu0 0
        %468 = vmatprep.subr.bf16.mxu0 0
        %469 = vmatpush1.bf16.msra.mxu0 0
        %470 = vmatprep.subr.bf16.mxu0 0
        %471 = vmatpush1.bf16.msra.mxu0 0
        %472 = vmatprep.subr.bf16.mxu0 0
        %473 = vmatpush1.bf16.msra.mxu0 0
        %474 = vmatprep.subr.bf16.mxu0 0
        %475 = vmatpush1.bf16.msra.mxu0 0
        %476 = vmatprep.subr.bf16.mxu0 0
        %477 = vmatpush1.bf16.msra.mxu0 0
        %478 = vmatprep.subr.bf16.mxu0 0
        %479 = vmatpush1.bf16.msra.mxu0 0
        %480 = vmatprep.subr.bf16.mxu0 0
        %481 = vmatpush1.bf16.msra.mxu0 0
        %482 = vmatprep.subr.bf16.mxu0 0
        %483 = vmatpush1.bf16.msra.mxu0 0
        %484 = vmatprep.subr.bf16.mxu0 0
        %485 = vmatpush1.bf16.msra.mxu0 0
        %486 = vmatprep.subr.bf16.mxu0 0
        %487 = vmatpush1.bf16.msra.mxu0 0
        %488 = vmatprep.subr.bf16.mxu0 0
        %489 = vmatpush1.bf16.msra.mxu0 0
        %490 = vmatprep.subr.bf16.mxu0 0
        %491 = vmatpush1.bf16.msra.mxu0 0
        %492 = vmatprep.subr.bf16.mxu0 0
        %493 = vmatpush1.bf16.msra.mxu0 0
        %494 = vmatprep.subr.bf16.mxu0 0
        %495 = vmatpush1.bf16.msra.mxu0 0
        %496 = vmatprep.mubr.bf16.mxu0 0
        %497 = vmatmul.mubr.bf16.gmra.mrb[0].mxu0 %v453
        %v498 = vpop.f32.mrb[0].mxu0
        %v499 = vadd.f32 0.0, %v498
        %v500 = vpop.f32.mrb[0].mxu0
        %v501 = vpop.f32.mrb[0].mxu0
        %v502 = vadd.f32 0.0, %v501
        %v503 = vpop.f32.mrb[0].mxu0
        %504 = vmatprep.mubr.bf16.mxu0 0
        %505 = vmatmul.mubr.bf16.gmra.mrb[0].mxu0 %v456
        %v506 = vpop.f32.mrb[0].mxu0
        %v507 = vadd.f32 0.0, %v506
        %v508 = vpop.f32.mrb[0].mxu0
        %v509 = vpop.f32.mrb[0].mxu0
        %v510 = vadd.f32 0.0, %v509
        %v511 = vpop.f32.mrb[0].mxu0
        %512 = vmatprep.mubr.bf16.mxu0 0
        %513 = vmatmul.mubr.bf16.gmra.mrb[0].mxu0 %v459
        %v514 = vpop.f32.mrb[0].mxu0
        %v515 = vadd.f32 0.0, %v514
        %v516 = vpop.f32.mrb[0].mxu0
        %v517 = vpop.f32.mrb[0].mxu0
        %v518 = vadd.f32 0.0, %v517
        %v519 = vpop.f32.mrb[0].mxu0
        %520 = vmatprep.mubr.bf16.mxu0 0
        %521 = vmatmul.mubr.bf16.gmra.mrb[0].mxu0 %v462
        %v522 = vpop.f32.mrb[0].mxu0
        %v523 = vadd.f32 0.0, %v522
        %v524 = vpop.f32.mrb[0].mxu0
        %v525 = vpop.f32.mrb[0].mxu0
        %v526 = vadd.f32 0.0, %v525
        %v527 = vpop.f32.mrb[0].mxu0
        %528 = vdwg.mxu0
        %v529 = vpack.c.bf16 %v502, %v499
        %v530 = vpack.c.bf16 %v510, %v507
        %v531 = vpack.c.bf16 %v518, %v515
        %v532 = vpack.c.bf16 %v526, %v523
        %v533 = vld [vmem:[#allocation11] sm:$0xf]
        %v534 = vld [vmem:[#allocation11 + $0x4] sm:$0xf]
        %v535 = vld [vmem:[#allocation11 + $0x8] sm:$0xf]
        %v539 = vunpack.c.l.b16 %v533
        %v540 = vunpack.c.l.b16 %v534
        %v541 = vunpack.c.l.b16 %v535
        %v542 = vpack.c.b16 %v540, %v539
        %v543 = vpack.c.b16 %v541, %v541
        %vm545 = vcmask 195584
        %v547 = vsel %vm545, %v529, 0
        %v550 = vsel %vm545, %v530, 0
        %v553 = vsel %vm545, %v531, 0
        %v556 = vsel %vm545, %v532, 0
        %vm558 = vcmask 1043456
        %v560 = vsel %vm558, %v543, 0
        %562 = vmatprep.subr.bf16.mxu0 0
        %563 = vmatpush1.bf16.msra.mxu0 %v542
        %564 = vmatprep.subr.bf16.mxu0 0
        %565 = vmatpush1.bf16.msra.mxu0 %v560
        %566 = vmatprep.subr.bf16.mxu0 0
        %567 = vmatpush1.bf16.msra.mxu0 0
        %568 = vmatprep.subr.bf16.mxu0 0
        %569 = vmatpush1.bf16.msra.mxu0 0
        %570 = vmatprep.subr.bf16.mxu0 0
        %571 = vmatpush1.bf16.msra.mxu0 0
        %572 = vmatprep.subr.bf16.mxu0 0
        %573 = vmatpush1.bf16.msra.mxu0 0
        %574 = vmatprep.subr.bf16.mxu0 0
        %575 = vmatpush1.bf16.msra.mxu0 0
        %576 = vmatprep.subr.bf16.mxu0 0
        %577 = vmatpush1.bf16.msra.mxu0 0
        %578 = vmatprep.subr.bf16.mxu0 0
        %579 = vmatpush1.bf16.msra.mxu0 0
        %580 = vmatprep.subr.bf16.mxu0 0
        %581 = vmatpush1.bf16.msra.mxu0 0
        %582 = vmatprep.subr.bf16.mxu0 0
        %583 = vmatpush1.bf16.msra.mxu0 0
        %584 = vmatprep.subr.bf16.mxu0 0
        %585 = vmatpush1.bf16.msra.mxu0 0
        %586 = vmatprep.subr.bf16.mxu0 0
        %587 = vmatpush1.bf16.msra.mxu0 0
        %588 = vmatprep.subr.bf16.mxu0 0
        %589 = vmatpush1.bf16.msra.mxu0 0
        %590 = vmatprep.subr.bf16.mxu0 0
        %591 = vmatpush1.bf16.msra.mxu0 0
        %592 = vmatprep.subr.bf16.mxu0 0
        %593 = vmatpush1.bf16.msra.mxu0 0
        %594 = vmatprep.mubr.bf16.mxu0 0
        %595 = vmatmul.mubr.bf16.gmra.mrb[0].mxu0 %v547
        %v596 = vpop.f32.mrb[0].mxu0
        %v597 = vadd.f32 0.0, %v596
        %v598 = vpop.f32.mrb[0].mxu0
        %v599 = vpop.f32.mrb[0].mxu0
        %v600 = vadd.f32 0.0, %v599
        %v601 = vpop.f32.mrb[0].mxu0
        %602 = vmatprep.mubr.bf16.mxu0 0
        %603 = vmatmul.mubr.bf16.gmra.mrb[0].mxu0 %v550
        %v604 = vpop.f32.mrb[0].mxu0
        %v605 = vadd.f32 0.0, %v604
        %v606 = vpop.f32.mrb[0].mxu0
        %v607 = vpop.f32.mrb[0].mxu0
        %v608 = vadd.f32 0.0, %v607
        %v609 = vpop.f32.mrb[0].mxu0
        %610 = vmatprep.mubr.bf16.mxu0 0
        %611 = vmatmul.mubr.bf16.gmra.mrb[0].mxu0 %v553
        %v612 = vpop.f32.mrb[0].mxu0
        %v613 = vadd.f32 0.0, %v612
        %v614 = vpop.f32.mrb[0].mxu0
        %v615 = vpop.f32.mrb[0].mxu0
        %v616 = vadd.f32 0.0, %v615
        %v617 = vpop.f32.mrb[0].mxu0
        %618 = vmatprep.mubr.bf16.mxu0 0
        %619 = vmatmul.mubr.bf16.gmra.mrb[0].mxu0 %v556
        %v620 = vpop.f32.mrb[0].mxu0
        %v621 = vadd.f32 0.0, %v620
        %v622 = vpop.f32.mrb[0].mxu0
        %v623 = vpop.f32.mrb[0].mxu0
        %v624 = vadd.f32 0.0, %v623
        %v625 = vpop.f32.mrb[0].mxu0
        %626 = vdwg.mxu0
        %s627 = sld [smem:[#allocation8 + %s34]]
        %v628 = vstv %s627
        %v629 = vmul.f32 %v597, %v628
        %v630 = vmul.f32 %v600, %v628
        %v631 = vmul.f32 %v605, %v628
        %v632 = vmul.f32 %v608, %v628
        %v633 = vmul.f32 %v613, %v628
        %v634 = vmul.f32 %v616, %v628
        %v635 = vmul.f32 %v621, %v628
        %v636 = vmul.f32 %v624, %v628
        %s637 = sld [smem:[#allocation4 + %s34]]
        %s638 = smul.f32 %s637, %s627
        %v639 = vld [vmem:[#allocation13] sm:$0xff]
        %v640 = vld [vmem:[#allocation13 + $0x8] sm:$0xff]
        %v641 = vld [vmem:[#allocation13 + $0x10] sm:$0xff]
        %v642 = vld [vmem:[#allocation13 + $0x18] sm:$0xff]
        %v643 = vld [vmem:[#allocation13 + $0x20] sm:$0xff]
        %v644 = vld [vmem:[#allocation13 + $0x28] sm:$0xff]
        %v645 = vld [vmem:[#allocation13 + $0x30] sm:$0xff]
        %v646 = vld [vmem:[#allocation13 + $0x38] sm:$0xff]
        %v647 = vld [vmem:[#allocation14] sm:$0x1]
        %649 = vset.pattern.permute.xlu0 0
        %650 = vperm.xlu0 %649, %v639
        %v651 = vpop.permute.xlu0 %650
        %654 = vset.pattern.permute.xlu0 0
        %655 = vperm.xlu0 %654, %v640
        %v656 = vpop.permute.xlu0 %655
        %659 = vset.pattern.permute.xlu0 0
        %660 = vperm.xlu0 %659, %v641
        %v661 = vpop.permute.xlu0 %660
        %664 = vset.pattern.permute.xlu0 0
        %665 = vperm.xlu0 %664, %v642
        %v666 = vpop.permute.xlu0 %665
        %669 = vset.pattern.permute.xlu0 0
        %670 = vperm.xlu0 %669, %v643
        %v671 = vpop.permute.xlu0 %670
        %674 = vset.pattern.permute.xlu0 0
        %675 = vperm.xlu0 %674, %v644
        %v676 = vpop.permute.xlu0 %675
        %679 = vset.pattern.permute.xlu0 0
        %680 = vperm.xlu0 %679, %v645
        %v681 = vpop.permute.xlu0 %680
        %684 = vset.pattern.permute.xlu0 0
        %685 = vperm.xlu0 %684, %v646
        %v686 = vpop.permute.xlu0 %685
        %v689 = vlaneseq
        %v690 = vshrl.u32 %v689, 7
        %v691 = vsub.s32 0, %v690
        %v692 = vrot.slane %v647, %v691
        %v694 = vmul.f32 %v651, %v692
        %v695 = vmul.f32 %v656, %v692
        %v696 = vmul.f32 %v661, %v692
        %v697 = vmul.f32 %v666, %v692
        %v698 = vmul.f32 %v671, %v692
        %v699 = vmul.f32 %v676, %v692
        %v700 = vmul.f32 %v681, %v692
        %v701 = vmul.f32 %v686, %v692
        %v702 = vstv %s638
        %v703 = vmul.f32 %v702, %v694
        %v704 = vmul.f32 %v702, %v695
        %v705 = vmul.f32 %v702, %v696
        %v706 = vmul.f32 %v702, %v697
        %v707 = vmul.f32 %v702, %v698
        %v708 = vmul.f32 %v702, %v699
        %v709 = vmul.f32 %v702, %v700
        %v710 = vmul.f32 %v702, %v701
        %v711 = vsub.f32 %v629, %v703
        %v712 = vsub.f32 %v630, %v704
        %v713 = vsub.f32 %v631, %v705
        %v714 = vsub.f32 %v632, %v706
        %v715 = vsub.f32 %v633, %v707
        %v716 = vsub.f32 %v634, %v708
        %v717 = vsub.f32 %v635, %v709
        %v718 = vsub.f32 %v636, %v710
        %vm719 = vcmask 523264
        %720 = vst.msk [vmem:[%s409] sm:$0xff] %vm719, %v711
        %721 = vst.msk [vmem:[%s409 + $0x8] sm:$0xff] %vm719, %v712
        %722 = vst.msk [vmem:[%s409 + $0x10] sm:$0xff] %vm719, %v713
        %723 = vst.msk [vmem:[%s409 + $0x18] sm:$0xff] %vm719, %v714
        %724 = vst.msk [vmem:[%s409 + $0x20] sm:$0xff] %vm719, %v715
        %725 = vst.msk [vmem:[%s409 + $0x28] sm:$0xff] %vm719, %v716
        %726 = vst.msk [vmem:[%s409 + $0x30] sm:$0xff] %vm719, %v717
        %727 = vst.msk [vmem:[%s409 + $0x38] sm:$0xff] %vm719, %v718
        %s728 = sand.u32 %s218, 1
        %s729 = scalar_lea.sflag [#allocation6], %s728
        %s730 = sand.u32 %s218, 1
        %s731 = smul.addr %s730, 64
        %s732 = scalar_lea.vmem [#allocation16], %s731
        // Predicated region
        $region73: #{fn.1} parent=47 // pred_check
          %p733 = pneg %p228
        $region74: #{fn.1} parent=47 // pred_check_branch
          %735 = sbr.rel (%p733) target = $region76
        $region75: #{fn.1} parent=47 // pred_region
          %s736 = sld [smem:[#allocation3]]
          %s737 = smul.u32 8, %s35
          %s739 = ssub.s32 1024, 1024
          %740 = vsyncadd %s729, %s739
          %s741 = smul.addr %s34, 8
          %s742 = sadd.s32 %s737, %s741
          %s743 = smul.addr %s736, 24
          %s744 = sadd.s32 %s742, %s743
          %s745 = smul.addr %s744, 128
          %s746 = scalar_lea.hbm %s8, %s745
          %s747 = sshll.u32 %s732, 4
          %s748 = int_to_ptr.vmem [resolvable:$true] %s747
          %753 = dma.vmem_to_hbm [thread:$0]  %s748, 1024, %s746, %s729, 128, 128, 8
        $region76: #{fn.1} parent=47 // pred_fallthru
          _
      $region48: #{fn.1} parent=5 // pred_fallthru
        _
      %p754 = scmp.le.s32.totalorder 2, %s25
      // Predicated region
      $region77: #{fn.1} parent=5 // pred_check
        %p755 = pneg %p754
      $region78: #{fn.1} parent=5 // pred_check_branch
        %757 = sbr.rel (%p755) target = $region80
      $region79: #{fn.1} parent=5 // pred_region
        %s758 = ssub.s32 %s25, 2
        // Predicated region
        $region81: #{fn.1} parent=79 // pred_check
          %p759 = pneg %p234
        $region82: #{fn.1} parent=79 // pred_check_branch
          %761 = sbr.rel (%p759) target = $region84
        $region83: #{fn.1} parent=79 // pred_region
          %s762 = sand.u32 %s219, 1
          %s763 = scalar_lea.sflag [#allocation6], %s762
          %s764 = sand.u32 %s219, 1
          %s765 = smul.addr %s764, 64
          %s766 = scalar_lea.vmem [#allocation16], %s765
          %767 = dma.done %s763, 1024
        $region84: #{fn.1} parent=79 // pred_fallthru
          _
      $region80: #{fn.1} parent=5 // pred_fallthru
        _
    $region6: #{fn.1} parent=1 // loop_footer
      %s29 = sadd.s32 1, %s25
    $region7: #{fn.1} parent=1 // loop_footer_branch
      %24 = sbr.rel target = $region3
    $region8: #{fn.1} parent=1 // loop_exit
      _
    %768 = vsyncpa [#allocation5], 1
    %s769 = scalar_lea.sflag [#allocation5], 1
    %770 = vsyncpa %s769, 1
    %771 = vsyncpa [#allocation12], 1
    %772 = vsyncpa [#allocation15], 1
    %773 = vsyncpa [#allocation6], 1
    %s774 = scalar_lea.sflag [#allocation6], 1
    %775 = vsyncpa %s774, 1
    %776 = vsyncpa [#allocation7], 1
    %s777 = scalar_lea.sflag [#allocation7], 1
    %778 = vsyncpa %s777, 1
    %779 = vsyncpa [#allocation9], 1

</llo_original>
